<compile_context>
chip_gen: v7x
topology: tpu7x:2x2x1
jax: 0.10.0
libtpu: 0.0.40
codegen_flags: <defaults>
</compile_context>

<pallas_src>
import jax
import jax.numpy as jnp
from jax import lax
from jax.experimental import pallas as pl
from jax.experimental.pallas import tpu as pltpu

_SUBLANE = 8
_LANE = 128
_H_CHUNK = 512            # lanes per accumulation slice (bounds the f32 product temp)
_MAX_TM = 8192            # row-tile ceiling; VMEM budget governs below this
_MIN_STEPS = 8            # >= 4 grid steps per TensorCore on a 2-TC (v7x) chip
_MIN_TM_FOR_STEPS = 512   # but never shrink tiles below ~512 rows just for step count


def _round_up(x, m):
    return ((x + m - 1) // m) * m


def _vmem_budget_and_limit():
    """Per-generation VMEM sizing: ~cap/2 working-set budget, ~3*cap/4 scoped limit."""
    try:
        cap = int(pltpu.get_tpu_info().vmem_capacity_bytes)
    except Exception:
        cap = 64 << 20                       # assume the smallest target part (v7x)
    cap = min(max(cap, 64 << 20), 128 << 20)  # all target parts have 64-128 MiB / core
    return cap // 2, (cap // 4) * 3


def _choose_tm(M, H, x_itemsize, vmem_budget):
    """Largest row tile whose pipelined working set fits `vmem_budget`."""
    lane_h = _round_up(H, _LANE)
    chunk = min(lane_h, _H_CHUNK)
    # Per-row bytes: double-buffered lane-padded x row
    #              + bounded (tm, chunk) f32 product temp
    #              + double-buffered lane-padded (tm,1)->(tm,128) f32 output row.
    row_bytes = 2 * lane_h * x_itemsize + chunk * 4 + 2 * _LANE * 4
    # Fixed bytes: resident (1,H) weight row, 8-sublane padded, two pipeline buffers.
    fixed_bytes = 2 * _SUBLANE * lane_h * 4
    tm = (vmem_budget - fixed_bytes) // row_bytes
    tm = max((tm // _SUBLANE) * _SUBLANE, _SUBLANE)
    tm = min(tm, _MAX_TM)
    # Keep >= _MIN_STEPS grid steps for DMA/compute overlap (and the megacore
    # split on v7x), unless that would push tiles below ~512 rows.
    steps_tm = _round_up(pl.cdiv(M, _MIN_STEPS), _SUBLANE)
    tm = min(tm, max(steps_tm, _MIN_TM_FOR_STEPS))
    tm = min(tm, _round_up(M, _SUBLANE))
    return max(tm, _SUBLANE)


def _make_vpu_kernel(H, tm):
    """f32 path: VPU multiply + XLU lane-reduce, chunked over H so the f32
    product intermediate never exceeds (tm, _H_CHUNK)."""
    starts = list(range(0, H, _H_CHUNK))

    def kernel(x_ref, w_ref, b_ref, o_ref):
        # x_ref: (tm, H)   w_ref: (1, H) f32 (resident)   b_ref: (1,) f32 SMEM
        acc = jnp.zeros((tm, 1), jnp.float32)
        for s in starts:                       # static slices: zero-cost ref views
            e = min(s + _H_CHUNK, H)
            acc = acc + jnp.sum(x_ref[:, s:e] * w_ref[:, s:e],
                                axis=-1, keepdims=True)
        o_ref[...] = acc + b_ref[0]

    return kernel


def _mxu_kernel(x_ref, w_ref, b_ref, o_ref):
    """bf16 path: contraction on the (otherwise idle) MXU with f32 accumulation.
    The weight participates as bf16 (activations are already bf16-precision);
    accumulation stays f32, matching the FP32-value-head intent closely."""
    o_ref[...] = lax.dot_general(
        x_ref[...], w_ref[...],
        dimension_numbers=(((1,), (1,)), ((), ())),    # (tm,H) . (1,H)^T -> (tm,1)
        preferred_element_type=jnp.float32,
    ) + b_ref[0]


@jax.jit
def scalar_head(hidden_states, weight, bias):
    """hidden_states: (B, S, H); weight: (1, H) [torch nn.Linear layout]; bias: (1,)."""
    B, S, H = hidden_states.shape
    M = B * S
    x2d = hidden_states.reshape(M, H)

    vmem_budget, vmem_limit = _vmem_budget_and_limit()
    tm = _choose_tm(M, H, x2d.dtype.itemsize, vmem_budget)
    grid_m = pl.cdiv(M, tm)

    use_mxu = x2d.dtype == jnp.bfloat16
    if use_mxu:
        w_row = weight.astype(jnp.bfloat16).reshape(1, H)
        kernel = _mxu_kernel
    else:
        w_row = weight.astype(jnp.float32).reshape(1, H)   # FP32 weight row
        kernel = _make_vpu_kernel(H, tm)
    b_vec = bias.astype(jnp.float32).reshape(1)            # FP32 scalar bias

    out2d = pl.pallas_call(
        kernel,
        out_shape=jax.ShapeDtypeStruct((M, 1), jnp.float32),
        grid_spec=pltpu.PrefetchScalarGridSpec(
            num_scalar_prefetch=0,
            grid=(grid_m,),
            in_specs=[
                pl.BlockSpec((tm, H), lambda i: (i, 0)),            # x row tile
                pl.BlockSpec((1, H), lambda i: (0, 0)),             # resident weight row
                pl.BlockSpec(memory_space=pltpu.MemorySpace.SMEM),  # bias scalar
            ],
            out_specs=pl.BlockSpec((tm, 1), lambda i: (i, 0)),
        ),
        compiler_params=pltpu.CompilerParams(
            dimension_semantics=("parallel",),
            vmem_limit_bytes=vmem_limit,
        ),
    )(x2d, w_row, b_vec)

    return out2d.reshape(B, S, 1)


if __name__ == "__main__":
    key = jax.random.PRNGKey(0)
    k_x, k_w, k_b, k_x2 = jax.random.split(key, 4)

    # ---- main check: small f32 case (batch=2, seq=8, hidden=32) ----
    B, S, H = 2, 8, 32
    hidden_states = jax.random.normal(k_x, (B, S, H), dtype=jnp.float32)
    bound = 1.0 / jnp.sqrt(jnp.float32(H))
    weight = jax.random.uniform(k_w, (1, H), jnp.float32, -bound, bound)
    bias = jax.random.uniform(k_b, (1,), jnp.float32, -bound, bound)

    out = jax.block_until_ready(scalar_head(hidden_states, weight, bias))
    ref = jnp.sum(hidden_states * weight.reshape(1, 1, H), axis=-1, keepdims=True) + bias
    assert out.shape == (B, S, 1), out.shape
    assert jnp.allclose(out, ref, atol=1e-5, rtol=1e-5)

    # ---- multi-chunk f32 case (exercises the H-chunked accumulation path) ----
    B2, S2, H2 = 2, 64, 640
    x2 = jax.random.normal(k_x2, (B2, S2, H2), dtype=jnp.float32)
    bound2 = 1.0 / jnp.sqrt(jnp.float32(H2))
    w2 = jax.random.uniform(k_w, (1, H2), jnp.float32, -bound2, bound2)
    b2 = jax.random.uniform(k_b, (1,), jnp.float32, -bound2, bound2)
    out2 = jax.block_until_ready(scalar_head(x2, w2, b2))
    ref2 = jnp.sum(x2 * w2.reshape(1, 1, H2), axis=-1, keepdims=True) + b2
    assert out2.shape == (B2, S2, 1), out2.shape
    assert jnp.allclose(out2, ref2, atol=5e-4, rtol=5e-4)

    # ---- bf16 activations (exercises the MXU contraction path) ----
    x_bf16 = hidden_states.astype(jnp.bfloat16)
    out_bf = jax.block_until_ready(scalar_head(x_bf16, weight, bias))
    ref_bf = jnp.sum(x_bf16.astype(jnp.float32) * weight.reshape(1, 1, H),
                     axis=-1, keepdims=True) + bias
    assert out_bf.shape == (B, S, 1), out_bf.shape
    assert jnp.allclose(out_bf, ref_bf, atol=3e-2, rtol=3e-2)

    print("KERNEL_OK")
</pallas_src>

<mosaic_0001>
module attributes {stable_mosaic.version = 11 : i64} {
  func.func @kernel(%arg0: i32, %arg1: memref<16x32xf32, #tpu.memory_space<vmem>>, %arg2: memref<1x32xf32, #tpu.memory_space<vmem>>, %arg3: memref<1xf32, #tpu.memory_space<smem>>, %arg4: memref<16x1xf32, #tpu.memory_space<vmem>>) attributes {dimension_semantics = [#tpu.dimension_semantics<parallel>], iteration_bounds = array<i64: 1>, scalar_prefetch = 0 : i64, scratch_operands = 0 : i64, tpu.core_type = #tpu.core_type<tc>, window_params = [{transform_indices = @transform_0, window_bounds = array<i64: 16, 32>}, {pipeline_mode = #tpu.pipeline_mode<synchronous>, transform_indices = @transform_1, window_bounds = array<i64: 1, 32>}, {transform_indices = @transform_2, window_bounds = array<i64: 1>}, {transform_indices = @transform_3, window_bounds = array<i64: 16, 1>}]} {
    %cst = arith.constant 0.000000e+00 : f32
    %0 = vector.broadcast %cst : f32 to vector<16x1xf32>
    %c0 = arith.constant 0 : index
    %c0_0 = arith.constant 0 : index
    %1 = vector.load %arg1[%c0, %c0_0] : memref<16x32xf32, #tpu.memory_space<vmem>>, vector<16x32xf32>
    %c0_1 = arith.constant 0 : index
    %c0_2 = arith.constant 0 : index
    %2 = vector.load %arg2[%c0_1, %c0_2] : memref<1x32xf32, #tpu.memory_space<vmem>>, vector<1x32xf32>
    %3 = vector.broadcast %2 : vector<1x32xf32> to vector<16x32xf32>
    %4 = arith.mulf %1, %3 : vector<16x32xf32>
    %cst_3 = arith.constant dense<0.000000e+00> : vector<16xf32>
    %5 = vector.multi_reduction <add>, %4, %cst_3 [1] : vector<16x32xf32> to vector<16xf32>
    %6 = vector.shape_cast %5 : vector<16xf32> to vector<16x1xf32>
    %7 = arith.addf %0, %6 : vector<16x1xf32>
    %c0_4 = arith.constant 0 : index
    %8 = memref.load %arg3[%c0_4] : memref<1xf32, #tpu.memory_space<smem>>
    %9 = vector.broadcast %8 : f32 to vector<16x1xf32>
    %10 = arith.addf %7, %9 : vector<16x1xf32>
    %c0_5 = arith.constant 0 : index
    %c0_6 = arith.constant 0 : index
    %11 = vector.load %arg4[%c0_5, %c0_6] : memref<16x1xf32, #tpu.memory_space<vmem>>, vector<16x1xf32>
    tpu.vector_store %arg4[%c0_5, %c0_6], %10 {strides = array<i32>} : memref<16x1xf32, #tpu.memory_space<vmem>>, vector<16x1xf32>,
    return
  }
  func.func @transform_0(%arg0: i32) -> (i32, i32) {
    %c0_i32 = arith.constant 0 : i32
    %c0_i32_0 = arith.constant 0 : i32
    return %arg0, %c0_i32 : i32, i32
  }
  func.func @transform_1(%arg0: i32) -> (i32, i32) {
    %c0_i32 = arith.constant 0 : i32
    %c0_i32_0 = arith.constant 0 : i32
    %c0_i32_1 = arith.constant 0 : i32
    return %c0_i32, %c0_i32_0 : i32, i32
  }
  func.func @transform_2(%arg0: i32) -> i32 {
    %c0_i32 = arith.constant 0 : i32
    %c0_i32_0 = arith.constant 0 : i32
    return %c0_i32 : i32
  }
  func.func @transform_3(%arg0: i32) -> (i32, i32) {
    %c0_i32 = arith.constant 0 : i32
    %c0_i32_0 = arith.constant 0 : i32
    return %arg0, %c0_i32 : i32, i32
  }
}

</mosaic_0001>

<llo_original>
// kernel: scalar_head.1
$region0: #{scalar_head.1}
  #allocation0 [shape = 'u32[]', space=smem, size = 0x4, offset = 0x4, fixed_abs, tag = 'smem constant byte address 0x4 - core index']
  #allocation1 [shape = 'u32[144,128]{1,0:T(1,128)}', space=vmem, size = 0x12000, scoped, tag = 'internal scratch']
  #allocation2 [shape = 'f32[1]{0:T(128)S(6)}', space=smem, size = 0x200, scoped, tag = 'scoped memory for scalar_head.1']
  %s0 = inlined_call_operand.hbm [shape: f32[16,32], index: 0, kind: input, shape index: {}]
  %s1 = inlined_call_operand.vmem [shape: f32[1,32], index: 1, kind: input, shape index: {}]
  %s2 = inlined_call_operand.<no memory space> [shape: f32[1], index: 2, kind: input, shape index: {}]
  %s3 = inlined_call_operand.vmem [shape: f32[16,1], index: 3, kind: output, shape index: {}]
  %s4 = sld [smem:[#allocation0]]
  $region26: #{scalar_head.1} parent=0
    _
  %s6 = ssub.s32 1, %s4
  %s7 = scalar_select 0, %s6, %s4
  %8 = sst [smem:[#allocation2]] %s2
  $region1: #{scalar_head.1} parent=0
    #allocation3 [shape = 'u8[8192]{0}', space=vmem, size = 0x2000, scoped, tag = 'input window, operand 0, single buffered']
    #allocation4 [shape = 's32[1]{0}', space=sflag, size = 0x4, scoped, tag = 'scoped memory for scalar_head.1']
    %9 = vsyncpa [#allocation4], 0
    // Predicated region
    $region2: #{scalar_head.1} parent=1 // pred_check
      _
    $region3: #{scalar_head.1} parent=1 // pred_check_branch
      %11 = sbr.rel (0) target = $region5
    $region4: #{scalar_head.1} parent=1 // pred_region
      %s13 = ssub.s32 256, 256
      %14 = vsyncadd [#allocation4], %s13
      %s15 = sshll.u32 [#allocation3], 4
      %s16 = int_to_ptr.vmem [resolvable:$true] %s15
      %21 = dma.hbm_to_vmem [thread:$0]  %s0, 256, %s16, [#allocation4], 128, 128, 8
    $region5: #{scalar_head.1} parent=1 // pred_fallthru
      _
    // Predicated region
    $region6: #{scalar_head.1} parent=1 // pred_check
      _
    $region7: #{scalar_head.1} parent=1 // pred_check_branch
      %23 = sbr.rel (0) target = $region9
    $region8: #{scalar_head.1} parent=1 // pred_region
      _
    $region9: #{scalar_head.1} parent=1 // pred_fallthru
      _
    // Predicated region
    $region10: #{scalar_head.1} parent=1 // pred_check
      _
    $region11: #{scalar_head.1} parent=1 // pred_check_branch
      %25 = sbr.rel (0) target = $region13
    $region12: #{scalar_head.1} parent=1 // pred_region
      _
    $region13: #{scalar_head.1} parent=1 // pred_fallthru
      _
    // Predicated region
    $region14: #{scalar_head.1} parent=1 // pred_check
      _
    $region15: #{scalar_head.1} parent=1 // pred_check_branch
      %27 = sbr.rel (0) target = $region17
    $region16: #{scalar_head.1} parent=1 // pred_region
      %28 = dma.done [#allocation4], 256
    $region17: #{scalar_head.1} parent=1 // pred_fallthru
      _
    %v29 = vld [vmem:[#allocation3] sm:$0xff]
    %v30 = vld [vmem:[#allocation3 + $0x8] sm:$0xff]
    %v31 = vld [vmem:[%s1] sm:$0x1]
    %v33 = vlaneseq
    %v34 = vshrl.u32 %v33, 7
    %v35 = vsub.s32 0, %v34
    %v36 = vrot.slane %v31, %v35
    %v38 = vmul.f32 %v29, %v36
    %v39 = vmul.f32 %v30, %v36
    %vm40 = vcmask 261120
    %v41 = vsel %vm40, %v38, 0.0
    %42 = vadd.xlane.f32.xlu0 %v41
    %v43 = vpop.xlane.xlu0 %42
    %v44 = vsel %vm40, %v39, 0.0
    %45 = vadd.xlane.f32.xlu0 %v44
    %v46 = vpop.xlane.xlu0 %45
    %v47 = vadd.f32 %v43, 0.0
    %v48 = vadd.f32 %v46, 0.0
    %s49 = sld [smem:[#allocation2]]
    %v50 = vstv %s49
    %v51 = vadd.f32 %v47, %v50
    %v52 = vadd.f32 %v48, %v50
    %vm53 = vcmask 7168
    %54 = vst.msk [vmem:[%s3] sm:$0xff] %vm53, %v51
    %55 = vst.msk [vmem:[%s3 + $0x8] sm:$0xff] %vm53, %v52
    // Predicated region
    $region18: #{scalar_head.1} parent=1 // pred_check
      _
    $region19: #{scalar_head.1} parent=1 // pred_check_branch
      %57 = sbr.rel (0) target = $region21
    $region20: #{scalar_head.1} parent=1 // pred_region
      _
    $region21: #{scalar_head.1} parent=1 // pred_fallthru
      _
    // Predicated region
    $region22: #{scalar_head.1} parent=1 // pred_check
      _
    $region23: #{scalar_head.1} parent=1 // pred_check_branch
      %59 = sbr.rel (0) target = $region25
    $region24: #{scalar_head.1} parent=1 // pred_region
      _
    $region25: #{scalar_head.1} parent=1 // pred_fallthru
      _
    %60 = vsyncpa [#allocation4], 1

</llo_original>
